<compile_context>
chip_gen: v7x
topology: tpu7x:2x2x1
jax: 0.10.0
libtpu: 0.0.40
codegen_flags: <defaults>
</compile_context>

<pallas_src>
import functools

import numpy as np
import jax
import jax.numpy as jnp
from jax import lax
from jax.experimental import pallas as pl
from jax.experimental.pallas import tpu as pltpu

KERNEL_SIZE = 3
BN_EPS = 1e-5


def conv_module_kernel(x_ref, w1_ref, w2_ref, tbl_ref, o_ref, *,
                       ksize, nrows, hidden, pool_rows):
    """Single grid step over the whole (tiny) batch.

    x_ref   : (N, Cin)      flat input rows, N = B*L (multiple of 8)
    w1_ref  : (K, Cin, H)   conv1 weights
    w2_ref  : (K, H, HPAD)  conv2 weights, BN1 folded in, out-channels padded
    tbl_ref : (8+P, HPAD)   row 0: b1 | row 1: b2 (+BN1 shift) | row 2: BN2
                            scale | row 3: BN2 shift | rows 8:8+P: pooling /
                            row-select matrix (P, N) in the first N lanes
    o_ref   : (P, HPAD)     pooled output (P = sublane-padded B*out_len)
    """
    x = x_ref[...]

    # ---- conv1: K accumulated matmuls over rolled row views, + b1, ReLU.
    #      dropout1 = identity in inference mode. ----
    acc1 = jnp.dot(x, w1_ref[0], preferred_element_type=jnp.float32)
    for k in range(1, ksize):
        acc1 += jnp.dot(pltpu.roll(x, nrows - k, axis=0), w1_ref[k],
                        preferred_element_type=jnp.float32)
    h1 = jnp.maximum(acc1 + tbl_ref[0:1, 0:hidden], 0.0)

    # ---- conv2 (BN1 already folded into w2/b2): same rolled-accumulate
    #      scheme, + b2, ReLU.  dropout2 = identity. ----
    acc2 = jnp.dot(h1, w2_ref[0], preferred_element_type=jnp.float32)
    for k in range(1, ksize):
        acc2 += jnp.dot(pltpu.roll(h1, nrows - k, axis=0), w2_ref[k],
                        preferred_element_type=jnp.float32)
    h2 = jnp.maximum(acc2 + tbl_ref[1:2, :], 0.0)

    # ---- avg_pool1d as one constant-matrix matmul (also drops junk rows),
    #      then BN2 (exactly commutes with the averaging). ----
    pmat = tbl_ref[8:8 + pool_rows, 0:nrows]
    pooled = jnp.dot(pmat, h2, preferred_element_type=jnp.float32)
    o_ref[...] = (pooled * tbl_ref[2:3, :] + tbl_ref[3:4, :]).astype(o_ref.dtype)


def build_forward(params, batch, seq_len, resolution):
    """One-time prepare step: folds eval-mode BatchNorm, repacks weights,
    builds the packed constant table + pooling matrix, and returns a jitted
    forward(x: (B, L, Cin) f32) -> (B, H, out_len) f32 (PyTorch layout)."""
    K = KERNEL_SIZE
    H, Cin, _ = params["w1"].shape                  # torch layout (H, Cin, K)
    B, L = batch, seq_len
    L1 = L - K + 1
    L2 = L1 - K + 1
    pool_k = L2 // resolution
    out_len = L2 // pool_k                          # PyTorch avg_pool1d floor
    N = B * L                                       # flat rows (multiple of 8 here)
    HPAD = ((H + 127) // 128) * 128                 # lane-dense output channels
    OUT_ROWS = B * out_len
    P = ((OUT_ROWS + 7) // 8) * 8                   # sublane-padded pooled rows

    # ---------- host-side packing (numpy), executed exactly once ----------
    w1_kco = np.transpose(np.asarray(params["w1"], np.float32), (2, 1, 0))  # (K,Cin,H)
    w2_kco = np.transpose(np.asarray(params["w2"], np.float32), (2, 1, 0))  # (K,H,H)
    b1 = np.asarray(params["b1"], np.float32)
    b2 = np.asarray(params["b2"], np.float32)

    def fold_bn(gamma, beta, mean, var):
        scale = np.asarray(gamma, np.float32) / np.sqrt(
            np.asarray(var, np.float32) + BN_EPS)
        shift = np.asarray(beta, np.float32) - np.asarray(mean, np.float32) * scale
        return scale, shift

    s1, t1 = fold_bn(params["bn1_gamma"], params["bn1_beta"],
                     params["bn1_mean"], params["bn1_var"])
    s2, t2 = fold_bn(params["bn2_gamma"], params["bn2_beta"],
                     params["bn2_mean"], params["bn2_var"])

    # fold BN1 into conv2 (exact: BN1 affine, conv2 linear)
    w2f = w2_kco * s1[None, :, None]
    b2f = b2 + np.einsum("c,kco->o", t1, w2_kco)

    # conv2 output channels zero-padded to HPAD (lane-dense stores)
    w2p = np.zeros((K, H, HPAD), np.float32)
    w2p[..., :H] = w2f

    # packed constant table: biases / BN2 affine / pooling matrix
    tbl = np.zeros((8 + P, HPAD), np.float32)
    tbl[0, :H] = b1
    tbl[1, :H] = b2f
    tbl[2, :H] = s2
    tbl[3, :H] = t2
    for b in range(B):
        for r in range(out_len):
            start = b * L + r * pool_k
            tbl[8 + b * out_len + r, start:start + pool_k] = 1.0 / pool_k

    w1_d = jnp.asarray(w1_kco)
    w2_d = jnp.asarray(w2p)
    tbl_d = jnp.asarray(tbl)

    # ---------- pallas_call (built once) ----------
    kernel = functools.partial(conv_module_kernel, ksize=K, nrows=N,
                               hidden=H, pool_rows=P)

    def full(shape):
        return pl.BlockSpec(shape, lambda i, _n=len(shape): (0,) * _n)

    # NOTE(v7x): at larger batch, add a leading "parallel" grid axis over row
    # tiles so both TensorCores are used; pointless at this toy size.
    pallas_fn = pl.pallas_call(
        kernel,
        out_shape=jax.ShapeDtypeStruct((P, HPAD), jnp.float32),
        grid=(1,),
        in_specs=[
            full((N, Cin)),          # x (flat rows)
            full((K, Cin, H)),       # conv1 weights
            full((K, H, HPAD)),      # conv2 weights (BN1-folded, padded)
            full((8 + P, HPAD)),     # packed constants + pooling matrix
        ],
        out_specs=full((P, HPAD)),
        compiler_params=pltpu.CompilerParams(
            dimension_semantics=("arbitrary",)),
    )

    @jax.jit
    def forward(x):
        xf = x.astype(jnp.float32).reshape(N, Cin)
        out = pallas_fn(xf, w1_d, w2_d, tbl_d)
        out = out[:OUT_ROWS, :H].reshape(B, out_len, H)
        return jnp.transpose(out, (0, 2, 1))        # (B, H, out_len)

    return forward


def reference_forward(x, params, resolution):
    """Pure-JAX reference (NCL, lax.conv) used only to validate the kernel."""
    xc = jnp.transpose(x, (0, 2, 1))                # (B, Cin, L)

    def conv_bn(z, w, b, gamma, beta, mean, var):
        y = lax.conv_general_dilated(z, w, window_strides=(1,),
                                     padding="VALID",
                                     dimension_numbers=("NCH", "OIH", "NCH"))
        y = y + b[None, :, None]
        y = jnp.maximum(y, 0.0)
        scale = gamma / jnp.sqrt(var + BN_EPS)
        shift = beta - mean * scale
        return y * scale[None, :, None] + shift[None, :, None]

    y = conv_bn(xc, params["w1"], params["b1"], params["bn1_gamma"],
                params["bn1_beta"], params["bn1_mean"], params["bn1_var"])
    y = conv_bn(y, params["w2"], params["b2"], params["bn2_gamma"],
                params["bn2_beta"], params["bn2_mean"], params["bn2_var"])
    L2 = y.shape[2]
    pk = L2 // resolution
    out_len = L2 // pk
    y = y[:, :, :out_len * pk].reshape(y.shape[0], y.shape[1], out_len, pk)
    return jnp.mean(y, axis=-1)                     # (B, H, out_len)


if __name__ == "__main__":
    # input_size=8, hidden_size=32, kernel_size=3, resolution=5, seq_len=24
    B, L, CIN, H, RES = 2, 24, 8, 32, 5

    key = jax.random.PRNGKey(0)
    ks = jax.random.split(key, 13)
    params = {
        "w1": 0.1 * jax.random.normal(ks[0], (H, CIN, KERNEL_SIZE), jnp.float32),
        "b1": 0.1 * jax.random.normal(ks[1], (H,), jnp.float32),
        "w2": 0.1 * jax.random.normal(ks[2], (H, H, KERNEL_SIZE), jnp.float32),
        "b2": 0.1 * jax.random.normal(ks[3], (H,), jnp.float32),
        "bn1_gamma": 1.0 + 0.1 * jax.random.normal(ks[4], (H,), jnp.float32),
        "bn1_beta": 0.1 * jax.random.normal(ks[5], (H,), jnp.float32),
        "bn1_mean": 0.05 * jax.random.normal(ks[6], (H,), jnp.float32),
        "bn1_var": 1.0 + 0.1 * jax.random.uniform(ks[7], (H,), jnp.float32),
        "bn2_gamma": 1.0 + 0.1 * jax.random.normal(ks[8], (H,), jnp.float32),
        "bn2_beta": 0.1 * jax.random.normal(ks[9], (H,), jnp.float32),
        "bn2_mean": 0.05 * jax.random.normal(ks[10], (H,), jnp.float32),
        "bn2_var": 1.0 + 0.1 * jax.random.uniform(ks[11], (H,), jnp.float32),
    }
    x = jax.random.normal(ks[12], (B, L, CIN), jnp.float32)

    forward = build_forward(params, B, L, RES)      # one-time prepare (hoisted)
    out = jax.block_until_ready(forward(x))

    ref = jax.block_until_ready(reference_forward(x, params, RES))
    assert out.shape == (B, H, RES), out.shape
    assert jnp.allclose(out, ref, atol=1e-4, rtol=1e-4), \
        float(jnp.max(jnp.abs(out - ref)))

    # TODO(synk): dropout / BatchNorm batch-statistics (training mode) are
    # stochastic / stateful; inference semantics are implemented instead.
    print("KERNEL_OK")
</pallas_src>

<mosaic_0001>
module attributes {stable_mosaic.version = 11 : i64} {
  func.func @conv_module_kernel(%arg0: i32, %arg1: memref<48x8xf32, #tpu.memory_space<vmem>>, %arg2: memref<3x8x32xf32, #tpu.memory_space<vmem>>, %arg3: memref<3x32x128xf32, #tpu.memory_space<vmem>>, %arg4: memref<24x128xf32, #tpu.memory_space<vmem>>, %arg5: memref<16x128xf32, #tpu.memory_space<vmem>>) attributes {dimension_semantics = [#tpu.dimension_semantics<arbitrary>], iteration_bounds = array<i64: 1>, scalar_prefetch = 0 : i64, scratch_operands = 0 : i64, tpu.core_type = #tpu.core_type<tc>, window_params = [{pipeline_mode = #tpu.pipeline_mode<synchronous>, transform_indices = @transform_0, window_bounds = array<i64: 48, 8>}, {pipeline_mode = #tpu.pipeline_mode<synchronous>, transform_indices = @transform_1, window_bounds = array<i64: 3, 8, 32>}, {pipeline_mode = #tpu.pipeline_mode<synchronous>, transform_indices = @transform_2, window_bounds = array<i64: 3, 32, 128>}, {pipeline_mode = #tpu.pipeline_mode<synchronous>, transform_indices = @transform_3, window_bounds = array<i64: 24, 128>}, {pipeline_mode = #tpu.pipeline_mode<synchronous>, transform_indices = @transform_4, window_bounds = array<i64: 16, 128>}]} {
    %c0 = arith.constant 0 : index
    %c0_0 = arith.constant 0 : index
    %0 = vector.load %arg1[%c0, %c0_0] : memref<48x8xf32, #tpu.memory_space<vmem>>, vector<48x8xf32>
    %c0_1 = arith.constant 0 : index
    %c0_2 = arith.constant 0 : index
    %c0_3 = arith.constant 0 : index
    %1 = vector.load %arg2[%c0_1, %c0_2, %c0_3] : memref<3x8x32xf32, #tpu.memory_space<vmem>>, vector<1x8x32xf32>
    %2 = vector.shape_cast %1 : vector<1x8x32xf32> to vector<8x32xf32>
    %cst = arith.constant dense<0.000000e+00> : vector<48x32xf32>
    %3 = tpu.matmul %0, %2, %cst {dimension_numbers = #tpu.dot_dimension_numbers<[1], [0], [0], [1], [0, 0, 1, 1], [], []>} : vector<48x8xf32>, vector<8x32xf32>, vector<48x32xf32> -> vector<48x32xf32>
    %c47_i32 = arith.constant 47 : i32
    %4 = tpu.dynamic_rotate %0 by %c47_i32 dim 0 : vector<48x8xf32>, i32 -> vector<48x8xf32>
    %c1 = arith.constant 1 : index
    %c0_4 = arith.constant 0 : index
    %c0_5 = arith.constant 0 : index
    %5 = vector.load %arg2[%c1, %c0_4, %c0_5] : memref<3x8x32xf32, #tpu.memory_space<vmem>>, vector<1x8x32xf32>
    %6 = vector.shape_cast %5 : vector<1x8x32xf32> to vector<8x32xf32>
    %cst_6 = arith.constant dense<0.000000e+00> : vector<48x32xf32>
    %7 = tpu.matmul %4, %6, %cst_6 {dimension_numbers = #tpu.dot_dimension_numbers<[1], [0], [0], [1], [0, 0, 1, 1], [], []>} : vector<48x8xf32>, vector<8x32xf32>, vector<48x32xf32> -> vector<48x32xf32>
    %8 = arith.addf %3, %7 : vector<48x32xf32>
    %c46_i32 = arith.constant 46 : i32
    %9 = tpu.dynamic_rotate %0 by %c46_i32 dim 0 : vector<48x8xf32>, i32 -> vector<48x8xf32>
    %c2 = arith.constant 2 : index
    %c0_7 = arith.constant 0 : index
    %c0_8 = arith.constant 0 : index
    %10 = vector.load %arg2[%c2, %c0_7, %c0_8] : memref<3x8x32xf32, #tpu.memory_space<vmem>>, vector<1x8x32xf32>
    %11 = vector.shape_cast %10 : vector<1x8x32xf32> to vector<8x32xf32>
    %cst_9 = arith.constant dense<0.000000e+00> : vector<48x32xf32>
    %12 = tpu.matmul %9, %11, %cst_9 {dimension_numbers = #tpu.dot_dimension_numbers<[1], [0], [0], [1], [0, 0, 1, 1], [], []>} : vector<48x8xf32>, vector<8x32xf32>, vector<48x32xf32> -> vector<48x32xf32>
    %13 = arith.addf %8, %12 : vector<48x32xf32>
    %c0_10 = arith.constant 0 : index
    %c0_11 = arith.constant 0 : index
    %14 = vector.load %arg4[%c0_10, %c0_11] : memref<24x128xf32, #tpu.memory_space<vmem>>, vector<1x32xf32>
    %15 = vector.broadcast %14 : vector<1x32xf32> to vector<48x32xf32>
    %16 = arith.addf %13, %15 : vector<48x32xf32>
    %cst_12 = arith.constant 0.000000e+00 : f32
    %17 = vector.broadcast %cst_12 : f32 to vector<48x32xf32>
    %18 = arith.maximumf %16, %17 : vector<48x32xf32>
    %c0_13 = arith.constant 0 : index
    %c0_14 = arith.constant 0 : index
    %c0_15 = arith.constant 0 : index
    %19 = vector.load %arg3[%c0_13, %c0_14, %c0_15] : memref<3x32x128xf32, #tpu.memory_space<vmem>>, vector<1x32x128xf32>
    %20 = vector.shape_cast %19 : vector<1x32x128xf32> to vector<32x128xf32>
    %cst_16 = arith.constant dense<0.000000e+00> : vector<48x128xf32>
    %21 = tpu.matmul %18, %20, %cst_16 {dimension_numbers = #tpu.dot_dimension_numbers<[1], [0], [0], [1], [0, 0, 1, 1], [], []>} : vector<48x32xf32>, vector<32x128xf32>, vector<48x128xf32> -> vector<48x128xf32>
    %c47_i32_17 = arith.constant 47 : i32
    %22 = tpu.dynamic_rotate %18 by %c47_i32_17 dim 0 : vector<48x32xf32>, i32 -> vector<48x32xf32>
    %c1_18 = arith.constant 1 : index
    %c0_19 = arith.constant 0 : index
    %c0_20 = arith.constant 0 : index
    %23 = vector.load %arg3[%c1_18, %c0_19, %c0_20] : memref<3x32x128xf32, #tpu.memory_space<vmem>>, vector<1x32x128xf32>
    %24 = vector.shape_cast %23 : vector<1x32x128xf32> to vector<32x128xf32>
    %cst_21 = arith.constant dense<0.000000e+00> : vector<48x128xf32>
    %25 = tpu.matmul %22, %24, %cst_21 {dimension_numbers = #tpu.dot_dimension_numbers<[1], [0], [0], [1], [0, 0, 1, 1], [], []>} : vector<48x32xf32>, vector<32x128xf32>, vector<48x128xf32> -> vector<48x128xf32>
    %26 = arith.addf %21, %25 : vector<48x128xf32>
    %c46_i32_22 = arith.constant 46 : i32
    %27 = tpu.dynamic_rotate %18 by %c46_i32_22 dim 0 : vector<48x32xf32>, i32 -> vector<48x32xf32>
    %c2_23 = arith.constant 2 : index
    %c0_24 = arith.constant 0 : index
    %c0_25 = arith.constant 0 : index
    %28 = vector.load %arg3[%c2_23, %c0_24, %c0_25] : memref<3x32x128xf32, #tpu.memory_space<vmem>>, vector<1x32x128xf32>
    %29 = vector.shape_cast %28 : vector<1x32x128xf32> to vector<32x128xf32>
    %cst_26 = arith.constant dense<0.000000e+00> : vector<48x128xf32>
    %30 = tpu.matmul %27, %29, %cst_26 {dimension_numbers = #tpu.dot_dimension_numbers<[1], [0], [0], [1], [0, 0, 1, 1], [], []>} : vector<48x32xf32>, vector<32x128xf32>, vector<48x128xf32> -> vector<48x128xf32>
    %31 = arith.addf %26, %30 : vector<48x128xf32>
    %c1_27 = arith.constant 1 : index
    %c0_28 = arith.constant 0 : index
    %32 = vector.load %arg4[%c1_27, %c0_28] : memref<24x128xf32, #tpu.memory_space<vmem>>, vector<1x128xf32>
    %33 = vector.broadcast %32 : vector<1x128xf32> to vector<48x128xf32>
    %34 = arith.addf %31, %33 : vector<48x128xf32>
    %cst_29 = arith.constant 0.000000e+00 : f32
    %35 = vector.broadcast %cst_29 : f32 to vector<48x128xf32>
    %36 = arith.maximumf %34, %35 : vector<48x128xf32>
    %c8 = arith.constant 8 : index
    %c0_30 = arith.constant 0 : index
    %37 = vector.load %arg4[%c8, %c0_30] : memref<24x128xf32, #tpu.memory_space<vmem>>, vector<16x48xf32>
    %cst_31 = arith.constant dense<0.000000e+00> : vector<16x128xf32>
    %38 = tpu.matmul %37, %36, %cst_31 {dimension_numbers = #tpu.dot_dimension_numbers<[1], [0], [0], [1], [0, 0, 1, 1], [], []>} : vector<16x48xf32>, vector<48x128xf32>, vector<16x128xf32> -> vector<16x128xf32>
    %c2_32 = arith.constant 2 : index
    %c0_33 = arith.constant 0 : index
    %39 = vector.load %arg4[%c2_32, %c0_33] : memref<24x128xf32, #tpu.memory_space<vmem>>, vector<1x128xf32>
    %40 = vector.broadcast %39 : vector<1x128xf32> to vector<16x128xf32>
    %41 = arith.mulf %38, %40 : vector<16x128xf32>
    %c3 = arith.constant 3 : index
    %c0_34 = arith.constant 0 : index
    %42 = vector.load %arg4[%c3, %c0_34] : memref<24x128xf32, #tpu.memory_space<vmem>>, vector<1x128xf32>
    %43 = vector.broadcast %42 : vector<1x128xf32> to vector<16x128xf32>
    %44 = arith.addf %41, %43 : vector<16x128xf32>
    %c0_35 = arith.constant 0 : index
    %c0_36 = arith.constant 0 : index
    %45 = vector.load %arg5[%c0_35, %c0_36] : memref<16x128xf32, #tpu.memory_space<vmem>>, vector<16x128xf32>
    tpu.vector_store %arg5[%c0_35, %c0_36], %44 {strides = array<i32>} : memref<16x128xf32, #tpu.memory_space<vmem>>, vector<16x128xf32>,
    return
  }
  func.func @transform_0(%arg0: i32) -> (i32, i32) {
    %c0_i32 = arith.constant 0 : i32
    %c0_i32_0 = arith.constant 0 : i32
    %c0_i32_1 = arith.constant 0 : i32
    return %c0_i32, %c0_i32_0 : i32, i32
  }
  func.func @transform_1(%arg0: i32) -> (i32, i32, i32) {
    %c0_i32 = arith.constant 0 : i32
    %c0_i32_0 = arith.constant 0 : i32
    %c0_i32_1 = arith.constant 0 : i32
    %c0_i32_2 = arith.constant 0 : i32
    return %c0_i32, %c0_i32_0, %c0_i32_1 : i32, i32, i32
  }
  func.func @transform_2(%arg0: i32) -> (i32, i32, i32) {
    %c0_i32 = arith.constant 0 : i32
    %c0_i32_0 = arith.constant 0 : i32
    %c0_i32_1 = arith.constant 0 : i32
    %c0_i32_2 = arith.constant 0 : i32
    return %c0_i32, %c0_i32_0, %c0_i32_1 : i32, i32, i32
  }
  func.func @transform_3(%arg0: i32) -> (i32, i32) {
    %c0_i32 = arith.constant 0 : i32
    %c0_i32_0 = arith.constant 0 : i32
    %c0_i32_1 = arith.constant 0 : i32
    return %c0_i32, %c0_i32_0 : i32, i32
  }
  func.func @transform_4(%arg0: i32) -> (i32, i32) {
    %c0_i32 = arith.constant 0 : i32
    %c0_i32_0 = arith.constant 0 : i32
    %c0_i32_1 = arith.constant 0 : i32
    return %c0_i32, %c0_i32_0 : i32, i32
  }
}

</mosaic_0001>

<llo_original>
// kernel: forward.1
$region0: #{forward.1}
  #allocation0 [shape = 'u32[]', space=smem, size = 0x4, offset = 0x4, fixed_abs, tag = 'smem constant byte address 0x4 - core index']
  #allocation1 [shape = 'u32[144,128]{1,0:T(1,128)}', space=vmem, size = 0x12000, scoped, tag = 'internal scratch']
  %s0 = inlined_call_operand.vmem [shape: f32[48,8], index: 0, kind: input, shape index: {}]
  %s1 = inlined_call_operand.vmem [shape: f32[3,8,32], index: 1, kind: input, shape index: {}]
  %s2 = inlined_call_operand.hbm [shape: f32[3,32,128], index: 2, kind: input, shape index: {}]
  %s3 = inlined_call_operand.vmem [shape: f32[24,128], index: 3, kind: input, shape index: {}]
  %s4 = inlined_call_operand.vmem [shape: f32[16,128], index: 4, kind: output, shape index: {}]
  %s5 = sld [smem:[#allocation0]]
  $region30: #{forward.1} parent=0
    _
  %s7 = ssub.s32 1, %s5
  %s8 = scalar_select 0, %s7, %s5
  $region1: #{forward.1} parent=0
    #allocation2 [shape = 'u8[49152]{0}', space=vmem, size = 0xc000, scoped, tag = 'input window, operand 2, single buffered']
    #allocation3 [shape = 's32[1]{0}', space=sflag, size = 0x4, scoped, tag = 'scoped memory for forward.1']
    %9 = vsyncpa [#allocation3], 0
    // Predicated region
    $region2: #{forward.1} parent=1 // pred_check
      _
    $region3: #{forward.1} parent=1 // pred_check_branch
      %11 = sbr.rel (0) target = $region5
    $region4: #{forward.1} parent=1 // pred_region
      _
    $region5: #{forward.1} parent=1 // pred_fallthru
      _
    // Predicated region
    $region6: #{forward.1} parent=1 // pred_check
      _
    $region7: #{forward.1} parent=1 // pred_check_branch
      %13 = sbr.rel (0) target = $region9
    $region8: #{forward.1} parent=1 // pred_region
      _
    $region9: #{forward.1} parent=1 // pred_fallthru
      _
    // Predicated region
    $region10: #{forward.1} parent=1 // pred_check
      _
    $region11: #{forward.1} parent=1 // pred_check_branch
      %15 = sbr.rel (0) target = $region13
    $region12: #{forward.1} parent=1 // pred_region
      %s17 = ssub.s32 1536, 1536
      %18 = vsyncadd [#allocation3], %s17
      %s19 = sshll.u32 [#allocation2], 4
      %s20 = int_to_ptr.vmem [resolvable:$true] %s19
      %25 = dma.hbm_to_vmem [thread:$0]  %s2, 1536, %s20, [#allocation3], 128, 128, 8
    $region13: #{forward.1} parent=1 // pred_fallthru
      _
    // Predicated region
    $region14: #{forward.1} parent=1 // pred_check
      _
    $region15: #{forward.1} parent=1 // pred_check_branch
      %27 = sbr.rel (0) target = $region17
    $region16: #{forward.1} parent=1 // pred_region
      _
    $region17: #{forward.1} parent=1 // pred_fallthru
      _
    // Predicated region
    $region18: #{forward.1} parent=1 // pred_check
      _
    $region19: #{forward.1} parent=1 // pred_check_branch
      %29 = sbr.rel (0) target = $region21
    $region20: #{forward.1} parent=1 // pred_region
      %30 = dma.done [#allocation3], 1536
    $region21: #{forward.1} parent=1 // pred_fallthru
      _
    %v31 = vld [vmem:[%s0] sm:$0xff]
    %v32 = vld [vmem:[%s0 + $0x8] sm:$0xff]
    %v33 = vld [vmem:[%s0 + $0x10] sm:$0xff]
    %v34 = vld [vmem:[%s0 + $0x18] sm:$0xff]
    %v35 = vld [vmem:[%s0 + $0x20] sm:$0xff]
    %v36 = vld [vmem:[%s0 + $0x28] sm:$0xff]
    %v37 = vld [vmem:[%s1] sm:$0xff]
    %v38 = vrot.slane %v31, 1
    %v39 = vrot.slane %v32, 1
    %v40 = vrot.slane %v33, 1
    %v41 = vrot.slane %v34, 1
    %v42 = vrot.slane %v35, 1
    %v43 = vrot.slane %v36, 1
    %v44 = vlaneseq
    %v45 = vshrl.u32 %v44, 7
    %vm46 = vcmp.lt.s32.totalorder %v45, 7
    %v47 = vsel %vm46, %v42, %v43
    %v48 = vsel %vm46, %v41, %v42
    %v49 = vsel %vm46, %v40, %v41
    %v50 = vsel %vm46, %v39, %v40
    %v51 = vsel %vm46, %v38, %v39
    %v52 = vsel %vm46, %v43, %v38
    %s53 = scalar_lea.vmem %s1, 8
    %v54 = vld [vmem:[%s53] sm:$0xff]
    %vm55 = vcmask 64512
    %v57 = vsel %vm55, %v51, 0
    %v60 = vsel %vm55, %v50, 0
    %v63 = vsel %vm55, %v49, 0
    %v66 = vsel %vm55, %v48, 0
    %v69 = vsel %vm55, %v47, 0
    %v72 = vsel %vm55, %v52, 0
    %74 = vmatprep.subr.mxu0 0.0
    %75 = vmatpush1.msra.mxu0 %v54
    %76 = vmatprep.subr.mxu0 0.0
    %77 = vmatpush1.msra.mxu0 0.0
    %78 = vmatprep.subr.mxu0 0.0
    %79 = vmatpush1.msra.mxu0 0.0
    %80 = vmatprep.subr.mxu0 0.0
    %81 = vmatpush1.msra.mxu0 0.0
    %82 = vmatprep.subr.mxu0 0.0
    %83 = vmatpush1.msra.mxu0 0.0
    %84 = vmatprep.subr.mxu0 0.0
    %85 = vmatpush1.msra.mxu0 0.0
    %86 = vmatprep.subr.mxu0 0.0
    %87 = vmatpush1.msra.mxu0 0.0
    %88 = vmatprep.subr.mxu0 0.0
    %89 = vmatpush1.msra.mxu0 0.0
    %90 = vmatprep.subr.mxu0 0.0
    %91 = vmatpush1.msra.mxu0 0.0
    %92 = vmatprep.subr.mxu0 0.0
    %93 = vmatpush1.msra.mxu0 0.0
    %94 = vmatprep.subr.mxu0 0.0
    %95 = vmatpush1.msra.mxu0 0.0
    %96 = vmatprep.subr.mxu0 0.0
    %97 = vmatpush1.msra.mxu0 0.0
    %98 = vmatprep.subr.mxu0 0.0
    %99 = vmatpush1.msra.mxu0 0.0
    %100 = vmatprep.subr.mxu0 0.0
    %101 = vmatpush1.msra.mxu0 0.0
    %102 = vmatprep.subr.mxu0 0.0
    %103 = vmatpush1.msra.mxu0 0.0
    %104 = vmatprep.subr.mxu0 0.0
    %105 = vmatpush1.msra.mxu0 0.0
    %106 = vmatprep.subr.mxu0 0.0
    %107 = vmatpush1.msra.mxu0 0.0
    %108 = vmatprep.subr.mxu0 0.0
    %109 = vmatpush1.msra.mxu0 0.0
    %110 = vmatprep.subr.mxu0 0.0
    %111 = vmatpush1.msra.mxu0 0.0
    %112 = vmatprep.subr.mxu0 0.0
    %113 = vmatpush1.msra.mxu0 0.0
    %114 = vmatprep.subr.mxu0 0.0
    %115 = vmatpush1.msra.mxu0 0.0
    %116 = vmatprep.subr.mxu0 0.0
    %117 = vmatpush1.msra.mxu0 0.0
    %118 = vmatprep.subr.mxu0 0.0
    %119 = vmatpush1.msra.mxu0 0.0
    %120 = vmatprep.subr.mxu0 0.0
    %121 = vmatpush1.msra.mxu0 0.0
    %122 = vmatprep.subr.mxu0 0.0
    %123 = vmatpush1.msra.mxu0 0.0
    %124 = vmatprep.subr.mxu0 0.0
    %125 = vmatpush1.msra.mxu0 0.0
    %126 = vmatprep.subr.mxu0 0.0
    %127 = vmatpush1.msra.mxu0 0.0
    %128 = vmatprep.subr.mxu0 0.0
    %129 = vmatpush1.msra.mxu0 0.0
    %130 = vmatprep.subr.mxu0 0.0
    %131 = vmatpush1.msra.mxu0 0.0
    %132 = vmatprep.subr.mxu0 0.0
    %133 = vmatpush1.msra.mxu0 0.0
    %134 = vmatprep.subr.mxu0 0.0
    %135 = vmatpush1.msra.mxu0 0.0
    %136 = vmatprep.subr.mxu0 0.0
    %137 = vmatpush1.msra.mxu0 0.0
    %138 = vmatprep.mubr.f32.mxu0 0.0
    %139 = vmatmul.mubr.f32.gmra.mrb[0].mxu0 %v57
    %v140 = vpop.f32.mrb[0].mxu0
    %v141 = vadd.f32 0.0, %v140
    %v142 = vpop.f32.mrb[0].mxu0
    %143 = vmatprep.mubr.f32.mxu0 0.0
    %144 = vmatmul.mubr.f32.gmra.mrb[0].mxu0 %v60
    %v145 = vpop.f32.mrb[0].mxu0
    %v146 = vadd.f32 0.0, %v145
    %v147 = vpop.f32.mrb[0].mxu0
    %148 = vmatprep.mubr.f32.mxu0 0.0
    %149 = vmatmul.mubr.f32.gmra.mrb[0].mxu0 %v63
    %v150 = vpop.f32.mrb[0].mxu0
    %v151 = vadd.f32 0.0, %v150
    %v152 = vpop.f32.mrb[0].mxu0
    %153 = vmatprep.mubr.f32.mxu0 0.0
    %154 = vmatmul.mubr.f32.gmra.mrb[0].mxu0 %v66
    %v155 = vpop.f32.mrb[0].mxu0
    %v156 = vadd.f32 0.0, %v155
    %v157 = vpop.f32.mrb[0].mxu0
    %158 = vmatprep.mubr.f32.mxu0 0.0
    %159 = vmatmul.mubr.f32.gmra.mrb[0].mxu0 %v69
    %v160 = vpop.f32.mrb[0].mxu0
    %v161 = vadd.f32 0.0, %v160
    %v162 = vpop.f32.mrb[0].mxu0
    %163 = vmatprep.mubr.f32.mxu0 0.0
    %164 = vmatmul.mubr.f32.gmra.mrb[0].mxu0 %v72
    %v165 = vpop.f32.mrb[0].mxu0
    %v166 = vadd.f32 0.0, %v165
    %v167 = vpop.f32.mrb[0].mxu0
    %168 = vdwg.mxu0
    %v170 = vsel %vm55, %v31, 0
    %v173 = vsel %vm55, %v32, 0
    %v176 = vsel %vm55, %v33, 0
    %v179 = vsel %vm55, %v34, 0
    %v182 = vsel %vm55, %v35, 0
    %v185 = vsel %vm55, %v36, 0
    %187 = vmatprep.subr.mxu0 0.0
    %188 = vmatpush1.msra.mxu0 %v37
    %189 = vmatprep.subr.mxu0 0.0
    %190 = vmatpush1.msra.mxu0 0.0
    %191 = vmatprep.subr.mxu0 0.0
    %192 = vmatpush1.msra.mxu0 0.0
    %193 = vmatprep.subr.mxu0 0.0
    %194 = vmatpush1.msra.mxu0 0.0
    %195 = vmatprep.subr.mxu0 0.0
    %196 = vmatpush1.msra.mxu0 0.0
    %197 = vmatprep.subr.mxu0 0.0
    %198 = vmatpush1.msra.mxu0 0.0
    %199 = vmatprep.subr.mxu0 0.0
    %200 = vmatpush1.msra.mxu0 0.0
    %201 = vmatprep.subr.mxu0 0.0
    %202 = vmatpush1.msra.mxu0 0.0
    %203 = vmatprep.subr.mxu0 0.0
    %204 = vmatpush1.msra.mxu0 0.0
    %205 = vmatprep.subr.mxu0 0.0
    %206 = vmatpush1.msra.mxu0 0.0
    %207 = vmatprep.subr.mxu0 0.0
    %208 = vmatpush1.msra.mxu0 0.0
    %209 = vmatprep.subr.mxu0 0.0
    %210 = vmatpush1.msra.mxu0 0.0
    %211 = vmatprep.subr.mxu0 0.0
    %212 = vmatpush1.msra.mxu0 0.0
    %213 = vmatprep.subr.mxu0 0.0
    %214 = vmatpush1.msra.mxu0 0.0
    %215 = vmatprep.subr.mxu0 0.0
    %216 = vmatpush1.msra.mxu0 0.0
    %217 = vmatprep.subr.mxu0 0.0
    %218 = vmatpush1.msra.mxu0 0.0
    %219 = vmatprep.subr.mxu0 0.0
    %220 = vmatpush1.msra.mxu0 0.0
    %221 = vmatprep.subr.mxu0 0.0
    %222 = vmatpush1.msra.mxu0 0.0
    %223 = vmatprep.subr.mxu0 0.0
    %224 = vmatpush1.msra.mxu0 0.0
    %225 = vmatprep.subr.mxu0 0.0
    %226 = vmatpush1.msra.mxu0 0.0
    %227 = vmatprep.subr.mxu0 0.0
    %228 = vmatpush1.msra.mxu0 0.0
    %229 = vmatprep.subr.mxu0 0.0
    %230 = vmatpush1.msra.mxu0 0.0
    %231 = vmatprep.subr.mxu0 0.0
    %232 = vmatpush1.msra.mxu0 0.0
    %233 = vmatprep.subr.mxu0 0.0
    %234 = vmatpush1.msra.mxu0 0.0
    %235 = vmatprep.subr.mxu0 0.0
    %236 = vmatpush1.msra.mxu0 0.0
    %237 = vmatprep.subr.mxu0 0.0
    %238 = vmatpush1.msra.mxu0 0.0
    %239 = vmatprep.subr.mxu0 0.0
    %240 = vmatpush1.msra.mxu0 0.0
    %241 = vmatprep.subr.mxu0 0.0
    %242 = vmatpush1.msra.mxu0 0.0
    %243 = vmatprep.subr.mxu0 0.0
    %244 = vmatpush1.msra.mxu0 0.0
    %245 = vmatprep.subr.mxu0 0.0
    %246 = vmatpush1.msra.mxu0 0.0
    %247 = vmatprep.subr.mxu0 0.0
    %248 = vmatpush1.msra.mxu0 0.0
    %249 = vmatprep.subr.mxu0 0.0
    %250 = vmatpush1.msra.mxu0 0.0
    %251 = vmatprep.mubr.f32.mxu0 0.0
    %252 = vmatmul.mubr.f32.gmra.mrb[0].mxu0 %v170
    %v253 = vpop.f32.mrb[0].mxu0
    %v254 = vadd.f32 %v141, %v253
    %v255 = vpop.f32.mrb[0].mxu0
    %256 = vmatprep.mubr.f32.mxu0 0.0
    %257 = vmatmul.mubr.f32.gmra.mrb[0].mxu0 %v173
    %v258 = vpop.f32.mrb[0].mxu0
    %v259 = vadd.f32 %v146, %v258
    %v260 = vpop.f32.mrb[0].mxu0
    %261 = vmatprep.mubr.f32.mxu0 0.0
    %262 = vmatmul.mubr.f32.gmra.mrb[0].mxu0 %v176
    %v263 = vpop.f32.mrb[0].mxu0
    %v264 = vadd.f32 %v151, %v263
    %v265 = vpop.f32.mrb[0].mxu0
    %266 = vmatprep.mubr.f32.mxu0 0.0
    %267 = vmatmul.mubr.f32.gmra.mrb[0].mxu0 %v179
    %v268 = vpop.f32.mrb[0].mxu0
    %v269 = vadd.f32 %v156, %v268
    %v270 = vpop.f32.mrb[0].mxu0
    %271 = vmatprep.mubr.f32.mxu0 0.0
    %272 = vmatmul.mubr.f32.gmra.mrb[0].mxu0 %v182
    %v273 = vpop.f32.mrb[0].mxu0
    %v274 = vadd.f32 %v161, %v273
    %v275 = vpop.f32.mrb[0].mxu0
    %276 = vmatprep.mubr.f32.mxu0 0.0
    %277 = vmatmul.mubr.f32.gmra.mrb[0].mxu0 %v185
    %v278 = vpop.f32.mrb[0].mxu0
    %v279 = vadd.f32 %v166, %v278
    %v280 = vpop.f32.mrb[0].mxu0
    %281 = vdwg.mxu0
    %v282 = vrot.slane %v31, 2
    %v283 = vrot.slane %v32, 2
    %v284 = vrot.slane %v33, 2
    %v285 = vrot.slane %v34, 2
    %v286 = vrot.slane %v35, 2
    %v287 = vrot.slane %v36, 2
    %vm288 = vcmp.lt.s32.totalorder %v45, 6
    %v289 = vsel %vm288, %v286, %v287
    %v290 = vsel %vm288, %v285, %v286
    %v291 = vsel %vm288, %v284, %v285
    %v292 = vsel %vm288, %v283, %v284
    %v293 = vsel %vm288, %v282, %v283
    %v294 = vsel %vm288, %v287, %v282
    %s295 = scalar_lea.vmem %s1, 16
    %v296 = vld [vmem:[%s295] sm:$0xff]
    %v298 = vsel %vm55, %v293, 0
    %v301 = vsel %vm55, %v292, 0
    %v304 = vsel %vm55, %v291, 0
    %v307 = vsel %vm55, %v290, 0
    %v310 = vsel %vm55, %v289, 0
    %v313 = vsel %vm55, %v294, 0
    %315 = vmatprep.subr.mxu0 0.0
    %316 = vmatpush1.msra.mxu0 %v296
    %317 = vmatprep.subr.mxu0 0.0
    %318 = vmatpush1.msra.mxu0 0.0
    %319 = vmatprep.subr.mxu0 0.0
    %320 = vmatpush1.msra.mxu0 0.0
    %321 = vmatprep.subr.mxu0 0.0
    %322 = vmatpush1.msra.mxu0 0.0
    %323 = vmatprep.subr.mxu0 0.0
    %324 = vmatpush1.msra.mxu0 0.0
    %325 = vmatprep.subr.mxu0 0.0
    %326 = vmatpush1.msra.mxu0 0.0
    %327 = vmatprep.subr.mxu0 0.0
    %328 = vmatpush1.msra.mxu0 0.0
    %329 = vmatprep.subr.mxu0 0.0
    %330 = vmatpush1.msra.mxu0 0.0
    %331 = vmatprep.subr.mxu0 0.0
    %332 = vmatpush1.msra.mxu0 0.0
    %333 = vmatprep.subr.mxu0 0.0
    %334 = vmatpush1.msra.mxu0 0.0
    %335 = vmatprep.subr.mxu0 0.0
    %336 = vmatpush1.msra.mxu0 0.0
    %337 = vmatprep.subr.mxu0 0.0
    %338 = vmatpush1.msra.mxu0 0.0
    %339 = vmatprep.subr.mxu0 0.0
    %340 = vmatpush1.msra.mxu0 0.0
    %341 = vmatprep.subr.mxu0 0.0
    %342 = vmatpush1.msra.mxu0 0.0
    %343 = vmatprep.subr.mxu0 0.0
    %344 = vmatpush1.msra.mxu0 0.0
    %345 = vmatprep.subr.mxu0 0.0
    %346 = vmatpush1.msra.mxu0 0.0
    %347 = vmatprep.subr.mxu0 0.0
    %348 = vmatpush1.msra.mxu0 0.0
    %349 = vmatprep.subr.mxu0 0.0
    %350 = vmatpush1.msra.mxu0 0.0
    %351 = vmatprep.subr.mxu0 0.0
    %352 = vmatpush1.msra.mxu0 0.0
    %353 = vmatprep.subr.mxu0 0.0
    %354 = vmatpush1.msra.mxu0 0.0
    %355 = vmatprep.subr.mxu0 0.0
    %356 = vmatpush1.msra.mxu0 0.0
    %357 = vmatprep.subr.mxu0 0.0
    %358 = vmatpush1.msra.mxu0 0.0
    %359 = vmatprep.subr.mxu0 0.0
    %360 = vmatpush1.msra.mxu0 0.0
    %361 = vmatprep.subr.mxu0 0.0
    %362 = vmatpush1.msra.mxu0 0.0
    %363 = vmatprep.subr.mxu0 0.0
    %364 = vmatpush1.msra.mxu0 0.0
    %365 = vmatprep.subr.mxu0 0.0
    %366 = vmatpush1.msra.mxu0 0.0
    %367 = vmatprep.subr.mxu0 0.0
    %368 = vmatpush1.msra.mxu0 0.0
    %369 = vmatprep.subr.mxu0 0.0
    %370 = vmatpush1.msra.mxu0 0.0
    %371 = vmatprep.subr.mxu0 0.0
    %372 = vmatpush1.msra.mxu0 0.0
    %373 = vmatprep.subr.mxu0 0.0
    %374 = vmatpush1.msra.mxu0 0.0
    %375 = vmatprep.subr.mxu0 0.0
    %376 = vmatpush1.msra.mxu0 0.0
    %377 = vmatprep.subr.mxu0 0.0
    %378 = vmatpush1.msra.mxu0 0.0
    %379 = vmatprep.mubr.f32.mxu0 0.0
    %380 = vmatmul.mubr.f32.gmra.mrb[0].mxu0 %v298
    %v381 = vpop.f32.mrb[0].mxu0
    %v382 = vadd.f32 0.0, %v381
    %v383 = vpop.f32.mrb[0].mxu0
    %384 = vmatprep.mubr.f32.mxu0 0.0
    %385 = vmatmul.mubr.f32.gmra.mrb[0].mxu0 %v301
    %v386 = vpop.f32.mrb[0].mxu0
    %v387 = vadd.f32 0.0, %v386
    %v388 = vpop.f32.mrb[0].mxu0
    %389 = vmatprep.mubr.f32.mxu0 0.0
    %390 = vmatmul.mubr.f32.gmra.mrb[0].mxu0 %v304
    %v391 = vpop.f32.mrb[0].mxu0
    %v392 = vadd.f32 0.0, %v391
    %v393 = vpop.f32.mrb[0].mxu0
    %394 = vmatprep.mubr.f32.mxu0 0.0
    %395 = vmatmul.mubr.f32.gmra.mrb[0].mxu0 %v307
    %v396 = vpop.f32.mrb[0].mxu0
    %v397 = vadd.f32 0.0, %v396
    %v398 = vpop.f32.mrb[0].mxu0
    %399 = vmatprep.mubr.f32.mxu0 0.0
    %400 = vmatmul.mubr.f32.gmra.mrb[0].mxu0 %v310
    %v401 = vpop.f32.mrb[0].mxu0
    %v402 = vadd.f32 0.0, %v401
    %v403 = vpop.f32.mrb[0].mxu0
    %404 = vmatprep.mubr.f32.mxu0 0.0
    %405 = vmatmul.mubr.f32.gmra.mrb[0].mxu0 %v313
    %v406 = vpop.f32.mrb[0].mxu0
    %v407 = vadd.f32 0.0, %v406
    %v408 = vpop.f32.mrb[0].mxu0
    %409 = vdwg.mxu0
    %v410 = vadd.f32 %v254, %v382
    %v411 = vadd.f32 %v259, %v387
    %v412 = vadd.f32 %v264, %v392
    %v413 = vadd.f32 %v269, %v397
    %v414 = vadd.f32 %v274, %v402
    %v415 = vadd.f32 %v279, %v407
    %v416 = vld [vmem:[%s3] sm:$0x1]
    %v417 = vlaneseq
    %v418 = vshrl.u32 %v417, 7
    %v419 = vsub.s32 0, %v418
    %v420 = vrot.slane %v416, %v419
    %v421 = vadd.f32 %v410, %v420
    %v422 = vadd.f32 %v411, %v420
    %v423 = vadd.f32 %v412, %v420
    %v424 = vadd.f32 %v413, %v420
    %v425 = vadd.f32 %v414, %v420
    %v426 = vadd.f32 %v415, %v420
    %v427 = vmax.f32 %v421, 0.0
    %v428 = vmax.f32 %v422, 0.0
    %v429 = vmax.f32 %v423, 0.0
    %v430 = vmax.f32 %v424, 0.0
    %v431 = vmax.f32 %v425, 0.0
    %v432 = vmax.f32 %v426, 0.0
    %v433 = vld [vmem:[#allocation2] sm:$0xff]
    %v434 = vld [vmem:[#allocation2 + $0x8] sm:$0xff]
    %v435 = vld [vmem:[#allocation2 + $0x10] sm:$0xff]
    %v436 = vld [vmem:[#allocation2 + $0x18] sm:$0xff]
    %v437 = vrot.slane %v427, 1
    %v438 = vrot.slane %v428, 1
    %v439 = vrot.slane %v429, 1
    %v440 = vrot.slane %v430, 1
    %v441 = vrot.slane %v431, 1
    %v442 = vrot.slane %v432, 1
    %v443 = vsel %vm46, %v441, %v442
    %v444 = vsel %vm46, %v440, %v441
    %v445 = vsel %vm46, %v439, %v440
    %v446 = vsel %vm46, %v438, %v439
    %v447 = vsel %vm46, %v437, %v438
    %v448 = vsel %vm46, %v442, %v437
    %s449 = scalar_lea.vmem [#allocation2], 32
    %v450 = vld [vmem:[%s449] sm:$0xff]
    %v451 = vld [vmem:[%s449 + $0x8] sm:$0xff]
    %v452 = vld [vmem:[%s449 + $0x10] sm:$0xff]
    %v453 = vld [vmem:[%s449 + $0x18] sm:$0xff]
    %vm454 = vcmask 261120
    %v456 = vsel %vm454, %v447, 0
    %v459 = vsel %vm454, %v446, 0
    %v462 = vsel %vm454, %v445, 0
    %v465 = vsel %vm454, %v444, 0
    %v468 = vsel %vm454, %v443, 0
    %v471 = vsel %vm454, %v448, 0
    %473 = vmatprep.subr.mxu0 0.0
    %474 = vmatpush1.msra.mxu0 %v450
    %475 = vmatprep.subr.mxu0 0.0
    %476 = vmatpush1.msra.mxu0 %v451
    %477 = vmatprep.subr.mxu0 0.0
    %478 = vmatpush1.msra.mxu0 %v452
    %479 = vmatprep.subr.mxu0 0.0
    %480 = vmatpush1.msra.mxu0 %v453
    %481 = vmatprep.subr.mxu0 0.0
    %482 = vmatpush1.msra.mxu0 0.0
    %483 = vmatprep.subr.mxu0 0.0
    %484 = vmatpush1.msra.mxu0 0.0
    %485 = vmatprep.subr.mxu0 0.0
    %486 = vmatpush1.msra.mxu0 0.0
    %487 = vmatprep.subr.mxu0 0.0
    %488 = vmatpush1.msra.mxu0 0.0
    %489 = vmatprep.subr.mxu0 0.0
    %490 = vmatpush1.msra.mxu0 0.0
    %491 = vmatprep.subr.mxu0 0.0
    %492 = vmatpush1.msra.mxu0 0.0
    %493 = vmatprep.subr.mxu0 0.0
    %494 = vmatpush1.msra.mxu0 0.0
    %495 = vmatprep.subr.mxu0 0.0
    %496 = vmatpush1.msra.mxu0 0.0
    %497 = vmatprep.subr.mxu0 0.0
    %498 = vmatpush1.msra.mxu0 0.0
    %499 = vmatprep.subr.mxu0 0.0
    %500 = vmatpush1.msra.mxu0 0.0
    %501 = vmatprep.subr.mxu0 0.0
    %502 = vmatpush1.msra.mxu0 0.0
    %503 = vmatprep.subr.mxu0 0.0
    %504 = vmatpush1.msra.mxu0 0.0
    %505 = vmatprep.subr.mxu0 0.0
    %506 = vmatpush1.msra.mxu0 0.0
    %507 = vmatprep.subr.mxu0 0.0
    %508 = vmatpush1.msra.mxu0 0.0
    %509 = vmatprep.subr.mxu0 0.0
    %510 = vmatpush1.msra.mxu0 0.0
    %511 = vmatprep.subr.mxu0 0.0
    %512 = vmatpush1.msra.mxu0 0.0
    %513 = vmatprep.subr.mxu0 0.0
    %514 = vmatpush1.msra.mxu0 0.0
    %515 = vmatprep.subr.mxu0 0.0
    %516 = vmatpush1.msra.mxu0 0.0
    %517 = vmatprep.subr.mxu0 0.0
    %518 = vmatpush1.msra.mxu0 0.0
    %519 = vmatprep.subr.mxu0 0.0
    %520 = vmatpush1.msra.mxu0 0.0
    %521 = vmatprep.subr.mxu0 0.0
    %522 = vmatpush1.msra.mxu0 0.0
    %523 = vmatprep.subr.mxu0 0.0
    %524 = vmatpush1.msra.mxu0 0.0
    %525 = vmatprep.subr.mxu0 0.0
    %526 = vmatpush1.msra.mxu0 0.0
    %527 = vmatprep.subr.mxu0 0.0
    %528 = vmatpush1.msra.mxu0 0.0
    %529 = vmatprep.subr.mxu0 0.0
    %530 = vmatpush1.msra.mxu0 0.0
    %531 = vmatprep.subr.mxu0 0.0
    %532 = vmatpush1.msra.mxu0 0.0
    %533 = vmatprep.subr.mxu0 0.0
    %534 = vmatpush1.msra.mxu0 0.0
    %535 = vmatprep.subr.mxu0 0.0
    %536 = vmatpush1.msra.mxu0 0.0
    %537 = vmatprep.mubr.f32.mxu0 0.0
    %538 = vmatmul.mubr.f32.gmra.mrb[0].mxu0 %v456
    %v539 = vpop.f32.mrb[0].mxu0
    %v540 = vadd.f32 0.0, %v539
    %v541 = vpop.f32.mrb[0].mxu0
    %542 = vmatprep.mubr.f32.mxu0 0.0
    %543 = vmatmul.mubr.f32.gmra.mrb[0].mxu0 %v459
    %v544 = vpop.f32.mrb[0].mxu0
    %v545 = vadd.f32 0.0, %v544
    %v546 = vpop.f32.mrb[0].mxu0
    %547 = vmatprep.mubr.f32.mxu0 0.0
    %548 = vmatmul.mubr.f32.gmra.mrb[0].mxu0 %v462
    %v549 = vpop.f32.mrb[0].mxu0
    %v550 = vadd.f32 0.0, %v549
    %v551 = vpop.f32.mrb[0].mxu0
    %552 = vmatprep.mubr.f32.mxu0 0.0
    %553 = vmatmul.mubr.f32.gmra.mrb[0].mxu0 %v465
    %v554 = vpop.f32.mrb[0].mxu0
    %v555 = vadd.f32 0.0, %v554
    %v556 = vpop.f32.mrb[0].mxu0
    %557 = vmatprep.mubr.f32.mxu0 0.0
    %558 = vmatmul.mubr.f32.gmra.mrb[0].mxu0 %v468
    %v559 = vpop.f32.mrb[0].mxu0
    %v560 = vadd.f32 0.0, %v559
    %v561 = vpop.f32.mrb[0].mxu0
    %562 = vmatprep.mubr.f32.mxu0 0.0
    %563 = vmatmul.mubr.f32.gmra.mrb[0].mxu0 %v471
    %v564 = vpop.f32.mrb[0].mxu0
    %v565 = vadd.f32 0.0, %v564
    %v566 = vpop.f32.mrb[0].mxu0
    %567 = vdwg.mxu0
    %v569 = vsel %vm454, %v427, 0
    %v572 = vsel %vm454, %v428, 0
    %v575 = vsel %vm454, %v429, 0
    %v578 = vsel %vm454, %v430, 0
    %v581 = vsel %vm454, %v431, 0
    %v584 = vsel %vm454, %v432, 0
    %586 = vmatprep.subr.mxu0 0.0
    %587 = vmatpush1.msra.mxu0 %v433
    %588 = vmatprep.subr.mxu0 0.0
    %589 = vmatpush1.msra.mxu0 %v434
    %590 = vmatprep.subr.mxu0 0.0
    %591 = vmatpush1.msra.mxu0 %v435
    %592 = vmatprep.subr.mxu0 0.0
    %593 = vmatpush1.msra.mxu0 %v436
    %594 = vmatprep.subr.mxu0 0.0
    %595 = vmatpush1.msra.mxu0 0.0
    %596 = vmatprep.subr.mxu0 0.0
    %597 = vmatpush1.msra.mxu0 0.0
    %598 = vmatprep.subr.mxu0 0.0
    %599 = vmatpush1.msra.mxu0 0.0
    %600 = vmatprep.subr.mxu0 0.0
    %601 = vmatpush1.msra.mxu0 0.0
    %602 = vmatprep.subr.mxu0 0.0
    %603 = vmatpush1.msra.mxu0 0.0
    %604 = vmatprep.subr.mxu0 0.0
    %605 = vmatpush1.msra.mxu0 0.0
    %606 = vmatprep.subr.mxu0 0.0
    %607 = vmatpush1.msra.mxu0 0.0
    %608 = vmatprep.subr.mxu0 0.0
    %609 = vmatpush1.msra.mxu0 0.0
    %610 = vmatprep.subr.mxu0 0.0
    %611 = vmatpush1.msra.mxu0 0.0
    %612 = vmatprep.subr.mxu0 0.0
    %613 = vmatpush1.msra.mxu0 0.0
    %614 = vmatprep.subr.mxu0 0.0
    %615 = vmatpush1.msra.mxu0 0.0
    %616 = vmatprep.subr.mxu0 0.0
    %617 = vmatpush1.msra.mxu0 0.0
    %618 = vmatprep.subr.mxu0 0.0
    %619 = vmatpush1.msra.mxu0 0.0
    %620 = vmatprep.subr.mxu0 0.0
    %621 = vmatpush1.msra.mxu0 0.0
    %622 = vmatprep.subr.mxu0 0.0
    %623 = vmatpush1.msra.mxu0 0.0
    %624 = vmatprep.subr.mxu0 0.0
    %625 = vmatpush1.msra.mxu0 0.0
    %626 = vmatprep.subr.mxu0 0.0
    %627 = vmatpush1.msra.mxu0 0.0
    %628 = vmatprep.subr.mxu0 0.0
    %629 = vmatpush1.msra.mxu0 0.0
    %630 = vmatprep.subr.mxu0 0.0
    %631 = vmatpush1.msra.mxu0 0.0
    %632 = vmatprep.subr.mxu0 0.0
    %633 = vmatpush1.msra.mxu0 0.0
    %634 = vmatprep.subr.mxu0 0.0
    %635 = vmatpush1.msra.mxu0 0.0
    %636 = vmatprep.subr.mxu0 0.0
    %637 = vmatpush1.msra.mxu0 0.0
    %638 = vmatprep.subr.mxu0 0.0
    %639 = vmatpush1.msra.mxu0 0.0
    %640 = vmatprep.subr.mxu0 0.0
    %641 = vmatpush1.msra.mxu0 0.0
    %642 = vmatprep.subr.mxu0 0.0
    %643 = vmatpush1.msra.mxu0 0.0
    %644 = vmatprep.subr.mxu0 0.0
    %645 = vmatpush1.msra.mxu0 0.0
    %646 = vmatprep.subr.mxu0 0.0
    %647 = vmatpush1.msra.mxu0 0.0
    %648 = vmatprep.subr.mxu0 0.0
    %649 = vmatpush1.msra.mxu0 0.0
    %650 = vmatprep.mubr.f32.mxu0 0.0
    %651 = vmatmul.mubr.f32.gmra.mrb[0].mxu0 %v569
    %v652 = vpop.f32.mrb[0].mxu0
    %v653 = vadd.f32 %v540, %v652
    %v654 = vpop.f32.mrb[0].mxu0
    %655 = vmatprep.mubr.f32.mxu0 0.0
    %656 = vmatmul.mubr.f32.gmra.mrb[0].mxu0 %v572
    %v657 = vpop.f32.mrb[0].mxu0
    %v658 = vadd.f32 %v545, %v657
    %v659 = vpop.f32.mrb[0].mxu0
    %660 = vmatprep.mubr.f32.mxu0 0.0
    %661 = vmatmul.mubr.f32.gmra.mrb[0].mxu0 %v575
    %v662 = vpop.f32.mrb[0].mxu0
    %v663 = vadd.f32 %v550, %v662
    %v664 = vpop.f32.mrb[0].mxu0
    %665 = vmatprep.mubr.f32.mxu0 0.0
    %666 = vmatmul.mubr.f32.gmra.mrb[0].mxu0 %v578
    %v667 = vpop.f32.mrb[0].mxu0
    %v668 = vadd.f32 %v555, %v667
    %v669 = vpop.f32.mrb[0].mxu0
    %670 = vmatprep.mubr.f32.mxu0 0.0
    %671 = vmatmul.mubr.f32.gmra.mrb[0].mxu0 %v581
    %v672 = vpop.f32.mrb[0].mxu0
    %v673 = vadd.f32 %v560, %v672
    %v674 = vpop.f32.mrb[0].mxu0
    %675 = vmatprep.mubr.f32.mxu0 0.0
    %676 = vmatmul.mubr.f32.gmra.mrb[0].mxu0 %v584
    %v677 = vpop.f32.mrb[0].mxu0
    %v678 = vadd.f32 %v565, %v677
    %v679 = vpop.f32.mrb[0].mxu0
    %680 = vdwg.mxu0
    %v681 = vrot.slane %v427, 2
    %v682 = vrot.slane %v428, 2
    %v683 = vrot.slane %v429, 2
    %v684 = vrot.slane %v430, 2
    %v685 = vrot.slane %v431, 2
    %v686 = vrot.slane %v432, 2
    %v687 = vsel %vm288, %v685, %v686
    %v688 = vsel %vm288, %v684, %v685
    %v689 = vsel %vm288, %v683, %v684
    %v690 = vsel %vm288, %v682, %v683
    %v691 = vsel %vm288, %v681, %v682
    %v692 = vsel %vm288, %v686, %v681
    %s693 = scalar_lea.vmem [#allocation2], 64
    %v694 = vld [vmem:[%s693] sm:$0xff]
    %v695 = vld [vmem:[%s693 + $0x8] sm:$0xff]
    %v696 = vld [vmem:[%s693 + $0x10] sm:$0xff]
    %v697 = vld [vmem:[%s693 + $0x18] sm:$0xff]
    %v699 = vsel %vm454, %v691, 0
    %v702 = vsel %vm454, %v690, 0
    %v705 = vsel %vm454, %v689, 0
    %v708 = vsel %vm454, %v688, 0
    %v711 = vsel %vm454, %v687, 0
    %v714 = vsel %vm454, %v692, 0
    %716 = vmatprep.subr.mxu0 0.0
    %717 = vmatpush1.msra.mxu0 %v694
    %718 = vmatprep.subr.mxu0 0.0
    %719 = vmatpush1.msra.mxu0 %v695
    %720 = vmatprep.subr.mxu0 0.0
    %721 = vmatpush1.msra.mxu0 %v696
    %722 = vmatprep.subr.mxu0 0.0
    %723 = vmatpush1.msra.mxu0 %v697
    %724 = vmatprep.subr.mxu0 0.0
    %725 = vmatpush1.msra.mxu0 0.0
    %726 = vmatprep.subr.mxu0 0.0
    %727 = vmatpush1.msra.mxu0 0.0
    %728 = vmatprep.subr.mxu0 0.0
    %729 = vmatpush1.msra.mxu0 0.0
    %730 = vmatprep.subr.mxu0 0.0
    %731 = vmatpush1.msra.mxu0 0.0
    %732 = vmatprep.subr.mxu0 0.0
    %733 = vmatpush1.msra.mxu0 0.0
    %734 = vmatprep.subr.mxu0 0.0
    %735 = vmatpush1.msra.mxu0 0.0
    %736 = vmatprep.subr.mxu0 0.0
    %737 = vmatpush1.msra.mxu0 0.0
    %738 = vmatprep.subr.mxu0 0.0
    %739 = vmatpush1.msra.mxu0 0.0
    %740 = vmatprep.subr.mxu0 0.0
    %741 = vmatpush1.msra.mxu0 0.0
    %742 = vmatprep.subr.mxu0 0.0
    %743 = vmatpush1.msra.mxu0 0.0
    %744 = vmatprep.subr.mxu0 0.0
    %745 = vmatpush1.msra.mxu0 0.0
    %746 = vmatprep.subr.mxu0 0.0
    %747 = vmatpush1.msra.mxu0 0.0
    %748 = vmatprep.subr.mxu0 0.0
    %749 = vmatpush1.msra.mxu0 0.0
    %750 = vmatprep.subr.mxu0 0.0
    %751 = vmatpush1.msra.mxu0 0.0
    %752 = vmatprep.subr.mxu0 0.0
    %753 = vmatpush1.msra.mxu0 0.0
    %754 = vmatprep.subr.mxu0 0.0
    %755 = vmatpush1.msra.mxu0 0.0
    %756 = vmatprep.subr.mxu0 0.0
    %757 = vmatpush1.msra.mxu0 0.0
    %758 = vmatprep.subr.mxu0 0.0
    %759 = vmatpush1.msra.mxu0 0.0
    %760 = vmatprep.subr.mxu0 0.0
    %761 = vmatpush1.msra.mxu0 0.0
    %762 = vmatprep.subr.mxu0 0.0
    %763 = vmatpush1.msra.mxu0 0.0
    %764 = vmatprep.subr.mxu0 0.0
    %765 = vmatpush1.msra.mxu0 0.0
    %766 = vmatprep.subr.mxu0 0.0
    %767 = vmatpush1.msra.mxu0 0.0
    %768 = vmatprep.subr.mxu0 0.0
    %769 = vmatpush1.msra.mxu0 0.0
    %770 = vmatprep.subr.mxu0 0.0
    %771 = vmatpush1.msra.mxu0 0.0
    %772 = vmatprep.subr.mxu0 0.0
    %773 = vmatpush1.msra.mxu0 0.0
    %774 = vmatprep.subr.mxu0 0.0
    %775 = vmatpush1.msra.mxu0 0.0
    %776 = vmatprep.subr.mxu0 0.0
    %777 = vmatpush1.msra.mxu0 0.0
    %778 = vmatprep.subr.mxu0 0.0
    %779 = vmatpush1.msra.mxu0 0.0
    %780 = vmatprep.mubr.f32.mxu0 0.0
    %781 = vmatmul.mubr.f32.gmra.mrb[0].mxu0 %v699
    %v782 = vpop.f32.mrb[0].mxu0
    %v783 = vadd.f32 0.0, %v782
    %v784 = vpop.f32.mrb[0].mxu0
    %785 = vmatprep.mubr.f32.mxu0 0.0
    %786 = vmatmul.mubr.f32.gmra.mrb[0].mxu0 %v702
    %v787 = vpop.f32.mrb[0].mxu0
    %v788 = vadd.f32 0.0, %v787
    %v789 = vpop.f32.mrb[0].mxu0
    %790 = vmatprep.mubr.f32.mxu0 0.0
    %791 = vmatmul.mubr.f32.gmra.mrb[0].mxu0 %v705
    %v792 = vpop.f32.mrb[0].mxu0
    %v793 = vadd.f32 0.0, %v792
    %v794 = vpop.f32.mrb[0].mxu0
    %795 = vmatprep.mubr.f32.mxu0 0.0
    %796 = vmatmul.mubr.f32.gmra.mrb[0].mxu0 %v708
    %v797 = vpop.f32.mrb[0].mxu0
    %v798 = vadd.f32 0.0, %v797
    %v799 = vpop.f32.mrb[0].mxu0
    %800 = vmatprep.mubr.f32.mxu0 0.0
    %801 = vmatmul.mubr.f32.gmra.mrb[0].mxu0 %v711
    %v802 = vpop.f32.mrb[0].mxu0
    %v803 = vadd.f32 0.0, %v802
    %v804 = vpop.f32.mrb[0].mxu0
    %805 = vmatprep.mubr.f32.mxu0 0.0
    %806 = vmatmul.mubr.f32.gmra.mrb[0].mxu0 %v714
    %v807 = vpop.f32.mrb[0].mxu0
    %v808 = vadd.f32 0.0, %v807
    %v809 = vpop.f32.mrb[0].mxu0
    %810 = vdwg.mxu0
    %v811 = vadd.f32 %v653, %v783
    %v812 = vadd.f32 %v658, %v788
    %v813 = vadd.f32 %v663, %v793
    %v814 = vadd.f32 %v668, %v798
    %v815 = vadd.f32 %v673, %v803
    %v816 = vadd.f32 %v678, %v808
    %v817 = vld [vmem:[%s3 + $0x1] sm:$0x1]
    %v818 = vlaneseq
    %v819 = vshrl.u32 %v818, 7
    %v820 = vsub.s32 0, %v819
    %v821 = vrot.slane %v817, %v820
    %v822 = vadd.f32 %v811, %v821
    %v823 = vadd.f32 %v812, %v821
    %v824 = vadd.f32 %v813, %v821
    %v825 = vadd.f32 %v814, %v821
    %v826 = vadd.f32 %v815, %v821
    %v827 = vadd.f32 %v816, %v821
    %v828 = vmax.f32 %v822, 0.0
    %v829 = vmax.f32 %v823, 0.0
    %v830 = vmax.f32 %v824, 0.0
    %v831 = vmax.f32 %v825, 0.0
    %v832 = vmax.f32 %v826, 0.0
    %v833 = vmax.f32 %v827, 0.0
    %v834 = vld [vmem:[%s3 + $0x8] sm:$0xff]
    %v835 = vld [vmem:[%s3 + $0x10] sm:$0xff]
    %vm836 = vcmask 392192
    %v838 = vsel %vm836, %v834, 0
    %v841 = vsel %vm836, %v835, 0
    %843 = vmatprep.subr.mxu0 0.0
    %844 = vmatpush1.msra.mxu0 %v828
    %845 = vmatprep.subr.mxu0 0.0
    %846 = vmatpush1.msra.mxu0 %v829
    %847 = vmatprep.subr.mxu0 0.0
    %848 = vmatpush1.msra.mxu0 %v830
    %849 = vmatprep.subr.mxu0 0.0
    %850 = vmatpush1.msra.mxu0 %v831
    %851 = vmatprep.subr.mxu0 0.0
    %852 = vmatpush1.msra.mxu0 %v832
    %853 = vmatprep.subr.mxu0 0.0
    %854 = vmatpush1.msra.mxu0 %v833
    %855 = vmatprep.subr.mxu0 0.0
    %856 = vmatpush1.msra.mxu0 0.0
    %857 = vmatprep.subr.mxu0 0.0
    %858 = vmatpush1.msra.mxu0 0.0
    %859 = vmatprep.subr.mxu0 0.0
    %860 = vmatpush1.msra.mxu0 0.0
    %861 = vmatprep.subr.mxu0 0.0
    %862 = vmatpush1.msra.mxu0 0.0
    %863 = vmatprep.subr.mxu0 0.0
    %864 = vmatpush1.msra.mxu0 0.0
    %865 = vmatprep.subr.mxu0 0.0
    %866 = vmatpush1.msra.mxu0 0.0
    %867 = vmatprep.subr.mxu0 0.0
    %868 = vmatpush1.msra.mxu0 0.0
    %869 = vmatprep.subr.mxu0 0.0
    %870 = vmatpush1.msra.mxu0 0.0
    %871 = vmatprep.subr.mxu0 0.0
    %872 = vmatpush1.msra.mxu0 0.0
    %873 = vmatprep.subr.mxu0 0.0
    %874 = vmatpush1.msra.mxu0 0.0
    %875 = vmatprep.subr.mxu0 0.0
    %876 = vmatpush1.msra.mxu0 0.0
    %877 = vmatprep.subr.mxu0 0.0
    %878 = vmatpush1.msra.mxu0 0.0
    %879 = vmatprep.subr.mxu0 0.0
    %880 = vmatpush1.msra.mxu0 0.0
    %881 = vmatprep.subr.mxu0 0.0
    %882 = vmatpush1.msra.mxu0 0.0
    %883 = vmatprep.subr.mxu0 0.0
    %884 = vmatpush1.msra.mxu0 0.0
    %885 = vmatprep.subr.mxu0 0.0
    %886 = vmatpush1.msra.mxu0 0.0
    %887 = vmatprep.subr.mxu0 0.0
    %888 = vmatpush1.msra.mxu0 0.0
    %889 = vmatprep.subr.mxu0 0.0
    %890 = vmatpush1.msra.mxu0 0.0
    %891 = vmatprep.subr.mxu0 0.0
    %892 = vmatpush1.msra.mxu0 0.0
    %893 = vmatprep.subr.mxu0 0.0
    %894 = vmatpush1.msra.mxu0 0.0
    %895 = vmatprep.subr.mxu0 0.0
    %896 = vmatpush1.msra.mxu0 0.0
    %897 = vmatprep.subr.mxu0 0.0
    %898 = vmatpush1.msra.mxu0 0.0
    %899 = vmatprep.subr.mxu0 0.0
    %900 = vmatpush1.msra.mxu0 0.0
    %901 = vmatprep.subr.mxu0 0.0
    %902 = vmatpush1.msra.mxu0 0.0
    %903 = vmatprep.subr.mxu0 0.0
    %904 = vmatpush1.msra.mxu0 0.0
    %905 = vmatprep.subr.mxu0 0.0
    %906 = vmatpush1.msra.mxu0 0.0
    %907 = vmatprep.mubr.f32.mxu0 0.0
    %908 = vmatmul.mubr.f32.gmra.mrb[0].mxu0 %v838
    %v909 = vpop.f32.mrb[0].mxu0
    %v910 = vadd.f32 0.0, %v909
    %v911 = vpop.f32.mrb[0].mxu0
    %912 = vmatprep.mubr.f32.mxu0 0.0
    %913 = vmatmul.mubr.f32.gmra.mrb[0].mxu0 %v841
    %v914 = vpop.f32.mrb[0].mxu0
    %v915 = vadd.f32 0.0, %v914
    %v916 = vpop.f32.mrb[0].mxu0
    %917 = vdwg.mxu0
    %v918 = vld [vmem:[%s3 + $0x2] sm:$0x1]
    %v919 = vlaneseq
    %v920 = vshrl.u32 %v919, 7
    %v921 = vsub.s32 0, %v920
    %v922 = vrot.slane %v918, %v921
    %v923 = vmul.f32 %v910, %v922
    %v924 = vmul.f32 %v915, %v922
    %v925 = vld [vmem:[%s3 + $0x3] sm:$0x1]
    %v926 = vlaneseq
    %v927 = vshrl.u32 %v926, 7
    %v928 = vsub.s32 0, %v927
    %v929 = vrot.slane %v925, %v928
    %v930 = vadd.f32 %v923, %v929
    %v931 = vadd.f32 %v924, %v929
    %932 = vst [vmem:[%s4] sm:$0xff] %v930
    %933 = vst [vmem:[%s4 + $0x8] sm:$0xff] %v931
    // Predicated region
    $region22: #{forward.1} parent=1 // pred_check
      _
    $region23: #{forward.1} parent=1 // pred_check_branch
      %935 = sbr.rel (0) target = $region25
    $region24: #{forward.1} parent=1 // pred_region
      _
    $region25: #{forward.1} parent=1 // pred_fallthru
      _
    // Predicated region
    $region26: #{forward.1} parent=1 // pred_check
      _
    $region27: #{forward.1} parent=1 // pred_check_branch
      %937 = sbr.rel (0) target = $region29
    $region28: #{forward.1} parent=1 // pred_region
      _
    $region29: #{forward.1} parent=1 // pred_fallthru
      _
    %938 = vsyncpa [#allocation3], 1

</llo_original>
